<compile_context>
chip_gen: v6e
topology: v6e:2x2x1
jax: 0.10.0
libtpu: 0.0.40
codegen_flags: <defaults>
</compile_context>

<pallas_src>
import math
from functools import partial

import jax
import jax.numpy as jnp
from jax.experimental import pallas as pl
from jax.experimental.pallas import tpu as pltpu


def _round_up(x, m):
    return (x + m - 1) // m * m


def _seg_sum(v, seg):
    """Segmented row sums, broadcast back to every lane of the segment.

    v:   (tm, 128) f32
    seg: (128, 128) bf16 block-diagonal 0/1 matrix (seg[j,k]=1 iff lanes j,k
         belong to the same group of D lanes).
    Uses a bf16 hi/lo split so the MXU (bf16 multiply, f32 accumulate) matches
    the f32 sum to ~1e-5 relative without relying on precision flags.
    """
    hi = v.astype(jnp.bfloat16)
    lo = (v - hi.astype(jnp.float32)).astype(jnp.bfloat16)
    out = jnp.dot(hi, seg, preferred_element_type=jnp.float32)
    out = out + jnp.dot(lo, seg, preferred_element_type=jnp.float32)
    return out


def _ln_kernel_packed(x_ref, w_ref, b_ref, seg_ref, o_ref, *, d, eps):
    # Lane-dense path for D < 128: g = 128 // d logical rows per kernel row.
    x = x_ref[...].astype(jnp.float32)            # (tm, 128)
    seg = seg_ref[...]                            # (128, 128) bf16, resident
    s1 = _seg_sum(x, seg)                         # per lane: sum(x) of its group
    s2 = _seg_sum(x * x, seg)                     # per lane: sum(x^2) of its group
    mean = s1 * (1.0 / d)
    var = (s2 - s1 * mean) * (1.0 / (d - 1))      # unbiased (ddof=1), one pass
    inv = jax.lax.rsqrt(var + eps)                # EUP slot, ~free
    o_ref[...] = ((x - mean) * inv * w_ref[...] + b_ref[...]).astype(o_ref.dtype)


def _ln_kernel_plain(x_ref, w_ref, b_ref, o_ref, *, d, eps):
    x = x_ref[...].astype(jnp.float32)            # (tm, D)
    s1 = jnp.sum(x, axis=-1, keepdims=True)
    s2 = jnp.sum(x * x, axis=-1, keepdims=True)
    mean = s1 * (1.0 / d)
    var = (s2 - s1 * mean) * (1.0 / (d - 1))      # unbiased (ddof=1), one pass
    inv = jax.lax.rsqrt(var + eps)
    o_ref[...] = ((x - mean) * inv * w_ref[...] + b_ref[...]).astype(o_ref.dtype)


def layernorm_pallas(x, weight, bias, eps=1e-6):
    norm_shape = tuple(weight.shape)
    nd = len(norm_shape)
    assert x.shape[x.ndim - nd:] == norm_shape, "trailing dims must match shape"
    D = math.prod(norm_shape)
    M = x.size // D
    dtype = x.dtype
    itemsize = jnp.dtype(dtype).itemsize

    w_flat = weight.reshape(-1).astype(jnp.float32)
    b_flat = bias.reshape(-1).astype(jnp.float32)

    # --- lane-density packing for small D (keep lanes & output stores dense) ---
    g = 1
    if 2 <= D < 128 and 128 % D == 0:
        g_try = 128 // D
        if M % g_try == 0 and M // g_try >= 8:
            g = g_try
    Dp = g * D                     # lane width of the kernel tile
    Mr = M // g                    # kernel rows

    x2 = x.reshape(Mr, Dp)                               # contiguous -> free reshape
    w2 = jnp.tile(w_flat, g).reshape(1, Dp)              # tiny resident params (f32)
    b2 = jnp.tile(b_flat, g).reshape(1, Dp)

    # --- VMEM-budget-aware row tile --------------------------------------------
    sub = max(8, 8 * (4 // itemsize))                    # dtype sublane packing
    budget = 2 * 1024 * 1024                             # ~2 MiB f32 working tile
    tm = max(sub, (budget // (Dp * 4)) // sub * sub)
    if tm >= Mr:
        tm = Mr                                          # single full-extent block
    if Mr > sub and pl.cdiv(Mr, tm) < 2:
        # ensure >=2 grid steps so "parallel" can shard rows across both v7x TCs
        tm = max(sub, _round_up(pl.cdiv(Mr, 2), sub))
    grid = (pl.cdiv(Mr, tm),)                            # ragged last block: Pallas
                                                         # masks OOB row writes

    # explicit VMEM limit: above v5e's 16 MiB scoped default, within v7x's 64 MiB
    tile_io = tm * Dp * itemsize
    tile_f32 = tm * Dp * 4
    est = 4 * tile_io + 8 * tile_f32 + 2 * Dp * Dp + 8 * Dp * 4
    vmem_limit = int(min(64 * 1024 * 1024, max(32 * 1024 * 1024, 2 * est)))

    in_specs = [
        pl.BlockSpec((tm, Dp), lambda i: (i, 0)),        # activation rows
        pl.BlockSpec((1, Dp), lambda i: (0, 0)),         # gamma (resident)
        pl.BlockSpec((1, Dp), lambda i: (0, 0)),         # beta  (resident)
    ]
    operands = [x2, w2, b2]
    if g > 1:
        lane = jnp.arange(Dp)
        seg = (lane[:, None] // D == lane[None, :] // D).astype(jnp.bfloat16)
        operands.append(seg)
        in_specs.append(pl.BlockSpec((Dp, Dp), lambda i: (0, 0)))   # resident
        kern = partial(_ln_kernel_packed, d=D, eps=float(eps))
        flops = 12 * Mr * Dp + 8 * Mr * Dp * Dp
    else:
        kern = partial(_ln_kernel_plain, d=D, eps=float(eps))
        flops = 12 * Mr * Dp

    cost = pl.CostEstimate(
        flops=int(flops),
        transcendentals=int(Mr * Dp),
        bytes_accessed=int(2 * Mr * Dp * itemsize + 2 * Dp * 4),
    )

    out = pl.pallas_call(
        kern,
        out_shape=jax.ShapeDtypeStruct((Mr, Dp), dtype),   # same dtype as input
        grid_spec=pltpu.PrefetchScalarGridSpec(
            num_scalar_prefetch=0,
            grid=grid,
            in_specs=in_specs,
            out_specs=pl.BlockSpec((tm, Dp), lambda i: (i, 0)),
        ),
        compiler_params=pltpu.CompilerParams(
            dimension_semantics=("parallel",),
            vmem_limit_bytes=vmem_limit,
        ),
        cost_estimate=cost,
    )(*operands)

    return out.reshape(x.shape)


if __name__ == "__main__":
    eps = 1e-6
    key = jax.random.PRNGKey(0)
    kx1, kx2, kx3, kw, kb = jax.random.split(key, 5)

    H = 32
    weight = 1.0 + 0.1 * jax.random.normal(kw, (H,), dtype=jnp.float32)
    bias = 0.1 * jax.random.normal(kb, (H,), dtype=jnp.float32)

    def ref_ln(xx, w, b, eps):
        xf = xx.astype(jnp.float32)
        mean = jnp.mean(xf, axis=-1, keepdims=True)
        var = jnp.var(xf, axis=-1, ddof=1, keepdims=True)   # unbiased, like torch .var()
        return (xf - mean) / jnp.sqrt(var + eps) * w + b

    # 1) module-sized case (B=2, S=8, hidden=32), f32
    x1 = jax.random.normal(kx1, (2, 8, H), dtype=jnp.float32)
    o1 = jax.block_until_ready(layernorm_pallas(x1, weight, bias, eps=eps))
    assert o1.shape == x1.shape and o1.dtype == x1.dtype
    assert jnp.allclose(o1, ref_ln(x1, weight, bias, eps), atol=1e-4, rtol=1e-4)

    # 2) enough rows to trigger the lane-dense packed path (D=32 -> 4 rows / vreg row)
    x2 = jax.random.normal(kx2, (4, 16, H), dtype=jnp.float32)
    o2 = jax.block_until_ready(layernorm_pallas(x2, weight, bias, eps=eps))
    assert jnp.allclose(o2, ref_ln(x2, weight, bias, eps), atol=1e-4, rtol=1e-4)

    # 3) ragged row count (exercises cdiv grid + masked last block)
    x3 = jax.random.normal(kx3, (3, 7, H), dtype=jnp.float32)
    o3 = jax.block_until_ready(layernorm_pallas(x3, weight, bias, eps=eps))
    assert jnp.allclose(o3, ref_ln(x3, weight, bias, eps), atol=1e-4, rtol=1e-4)

    # 4) bf16 stays bf16 end-to-end (no f32 round trip through HBM)
    x4 = x1.astype(jnp.bfloat16)
    o4 = jax.block_until_ready(layernorm_pallas(x4, weight, bias, eps=eps))
    assert o4.dtype == jnp.bfloat16
    assert jnp.allclose(o4.astype(jnp.float32), ref_ln(x4, weight, bias, eps),
                        atol=5e-2, rtol=5e-2)

    print("KERNEL_OK")
</pallas_src>

<mosaic_0001>
module attributes {stable_mosaic.version = 11 : i64} {
  func.func @_ln_kernel_plain(%arg0: i32, %arg1: memref<8x32xf32, #tpu.memory_space<vmem>>, %arg2: memref<1x32xf32, #tpu.memory_space<vmem>>, %arg3: memref<1x32xf32, #tpu.memory_space<vmem>>, %arg4: memref<8x32xf32, #tpu.memory_space<vmem>>) attributes {dimension_semantics = [#tpu.dimension_semantics<parallel>], iteration_bounds = array<i64: 2>, scalar_prefetch = 0 : i64, scratch_operands = 0 : i64, tpu.core_type = #tpu.core_type<tc>, window_params = [{transform_indices = @transform_0, window_bounds = array<i64: 8, 32>}, {pipeline_mode = #tpu.pipeline_mode<synchronous>, transform_indices = @transform_1, window_bounds = array<i64: 1, 32>}, {pipeline_mode = #tpu.pipeline_mode<synchronous>, transform_indices = @transform_2, window_bounds = array<i64: 1, 32>}, {transform_indices = @transform_3, window_bounds = array<i64: 8, 32>}]} {
    %c0 = arith.constant 0 : index
    %c0_0 = arith.constant 0 : index
    %0 = vector.load %arg1[%c0, %c0_0] : memref<8x32xf32, #tpu.memory_space<vmem>>, vector<8x32xf32>
    %cst = arith.constant dense<0.000000e+00> : vector<8xf32>
    %1 = vector.multi_reduction <add>, %0, %cst [1] : vector<8x32xf32> to vector<8xf32>
    %2 = vector.shape_cast %1 : vector<8xf32> to vector<8x1xf32>
    %3 = arith.mulf %0, %0 : vector<8x32xf32>
    %cst_1 = arith.constant dense<0.000000e+00> : vector<8xf32>
    %4 = vector.multi_reduction <add>, %3, %cst_1 [1] : vector<8x32xf32> to vector<8xf32>
    %5 = vector.shape_cast %4 : vector<8xf32> to vector<8x1xf32>
    %cst_2 = arith.constant 3.125000e-02 : f32
    %6 = vector.broadcast %cst_2 : f32 to vector<8x1xf32>
    %7 = arith.mulf %2, %6 : vector<8x1xf32>
    %8 = arith.mulf %2, %7 : vector<8x1xf32>
    %9 = arith.subf %5, %8 : vector<8x1xf32>
    %cst_3 = arith.constant 0.0322580636 : f32
    %10 = vector.broadcast %cst_3 : f32 to vector<8x1xf32>
    %11 = arith.mulf %9, %10 : vector<8x1xf32>
    %cst_4 = arith.constant 9.99999997E-7 : f32
    %12 = vector.broadcast %cst_4 : f32 to vector<8x1xf32>
    %13 = arith.addf %11, %12 : vector<8x1xf32>
    %14 = math.rsqrt %13 : vector<8x1xf32>
    %15 = vector.broadcast %7 : vector<8x1xf32> to vector<8x32xf32>
    %16 = arith.subf %0, %15 : vector<8x32xf32>
    %17 = vector.broadcast %14 : vector<8x1xf32> to vector<8x32xf32>
    %18 = arith.mulf %16, %17 : vector<8x32xf32>
    %c0_5 = arith.constant 0 : index
    %c0_6 = arith.constant 0 : index
    %19 = vector.load %arg2[%c0_5, %c0_6] : memref<1x32xf32, #tpu.memory_space<vmem>>, vector<1x32xf32>
    %20 = vector.broadcast %19 : vector<1x32xf32> to vector<8x32xf32>
    %21 = arith.mulf %18, %20 : vector<8x32xf32>
    %c0_7 = arith.constant 0 : index
    %c0_8 = arith.constant 0 : index
    %22 = vector.load %arg3[%c0_7, %c0_8] : memref<1x32xf32, #tpu.memory_space<vmem>>, vector<1x32xf32>
    %23 = vector.broadcast %22 : vector<1x32xf32> to vector<8x32xf32>
    %24 = arith.addf %21, %23 : vector<8x32xf32>
    %c0_9 = arith.constant 0 : index
    %c0_10 = arith.constant 0 : index
    %25 = vector.load %arg4[%c0_9, %c0_10] : memref<8x32xf32, #tpu.memory_space<vmem>>, vector<8x32xf32>
    tpu.vector_store %arg4[%c0_9, %c0_10], %24 {strides = array<i32>} : memref<8x32xf32, #tpu.memory_space<vmem>>, vector<8x32xf32>,
    return
  }
  func.func @transform_0(%arg0: i32) -> (i32, i32) {
    %c0_i32 = arith.constant 0 : i32
    %c0_i32_0 = arith.constant 0 : i32
    return %arg0, %c0_i32 : i32, i32
  }
  func.func @transform_1(%arg0: i32) -> (i32, i32) {
    %c0_i32 = arith.constant 0 : i32
    %c0_i32_0 = arith.constant 0 : i32
    %c0_i32_1 = arith.constant 0 : i32
    return %c0_i32, %c0_i32_0 : i32, i32
  }
  func.func @transform_2(%arg0: i32) -> (i32, i32) {
    %c0_i32 = arith.constant 0 : i32
    %c0_i32_0 = arith.constant 0 : i32
    %c0_i32_1 = arith.constant 0 : i32
    return %c0_i32, %c0_i32_0 : i32, i32
  }
  func.func @transform_3(%arg0: i32) -> (i32, i32) {
    %c0_i32 = arith.constant 0 : i32
    %c0_i32_0 = arith.constant 0 : i32
    return %arg0, %c0_i32 : i32, i32
  }
}

</mosaic_0001>

<llo_original>
// kernel: tpu_custom_call.1
$region0: #{tpu_custom_call.1}
  #allocation0 [shape = 'u32[]', space=smem, size = 0x4, offset = 0x4, fixed_abs, tag = 'smem constant byte address 0x4 - core index']
  #allocation1 [shape = 'u32[144,128]{1,0:T(1,128)}', space=vmem, size = 0x12000, scoped, tag = 'internal scratch']
  %s0 = inlined_call_operand.hbm [shape: f32[16,32], index: 0, kind: input, shape index: {}]
  %s1 = inlined_call_operand.vmem [shape: f32[1,32], index: 1, kind: input, shape index: {}]
  %s2 = inlined_call_operand.vmem [shape: f32[1,32], index: 2, kind: input, shape index: {}]
  %s3 = inlined_call_operand.hbm [shape: f32[16,32], index: 3, kind: output, shape index: {}]
  %s4 = sld [smem:[#allocation0]]
  $region49: #{tpu_custom_call.1} parent=0
    _
  %s6 = ssub.s32 1, %s4
  %s7 = scalar_select 0, %s6, %s4
  $region1: #{tpu_custom_call.1} parent=0
    #allocation2 [shape = 'u8[8192]{0}', space=vmem, size = 0x2000, scoped, tag = 'input window, operand 0']
    #allocation3 [shape = 's32[2]{0}', space=sflag, size = 0x8, scoped, tag = 'scoped memory for tpu_custom_call.1']
    #allocation4 [shape = 's32[2]{0}', space=sflag, size = 0x8, scoped, tag = 'scoped memory for tpu_custom_call.1']
    #allocation5 [shape = 'u8[8192]{0}', space=vmem, size = 0x2000, scoped, tag = 'output window, operand 0']
    %8 = vsyncpa [#allocation3], 0
    %s9 = scalar_lea.sflag [#allocation3], 1
    %10 = vsyncpa %s9, 0
    %11 = vsyncpa [#allocation4], 0
    %s12 = scalar_lea.sflag [#allocation4], 1
    %13 = vsyncpa %s12, 0
    loop: start=0, step=1, limit=4
    $region2: #{tpu_custom_call.1} parent=1 // loop_pre_header
      _
    $region3: #{tpu_custom_call.1} parent=1 // loop_header
      %s15 = sphi 0, %s19
      %p16 = scmp.ge.s32.totalorder %s15, 4
      %s25 = sphi 0, %s27
      %s28 = sphi 0, %s25
      %s29 = sphi 0, %s28
      %s45 = sphi 0, %s29
      %s49 = sphi 0, %s49
      %s51 = sphi 0, %s49
      %s52 = sphi 0, %s51
      %s66 = sphi 0, %s52
      %s70 = sphi 0, %s70
      %s72 = sphi 0, %s70
      %s73 = sphi 0, %s72
      %s87 = sphi 0, %s73
      %s93 = sphi 0, %s95
      %s96 = sphi 0, %s93
      %s97 = sphi 0, %s96
      %s113 = sphi 0, %s97
    $region4: #{tpu_custom_call.1} parent=1 // loop_header_branch
      %18 = sbr.rel (%p16) target = $region8
    $region5: #{tpu_custom_call.1} parent=1 // loop_body
      %s20 = ssub.s32 %s15, 1
      %s21 = ssub.s32 %s15, 2
      %s22 = sadd.s32 %s15, 1
      %s23 = ssub.s32 %s15, %s22
      %p24 = scmp.eq.s32.totalorder %s23, 0
      %s26 = sadd.s32 %s25, 1
      %s27 = scalar_select %p24, %s25, %s26
      %p30 = pneg %p24
      %p31 = scmp.eq.s32.totalorder %s15, 1
      %p32 = por %p30, %p31
      %p33 = scmp.ne.s32.totalorder %s25, %s28
      %p34 = scmp.eq.s32.totalorder %s15, 0
      %p35 = por %p33, %p34
      %p36 = scmp.ne.s32.totalorder %s25, %s28
      %p37 = scmp.eq.s32.totalorder %s20, 1
      %p38 = por %p36, %p37
      %p39 = scmp.ne.s32.totalorder %s28, %s29
      %p40 = scmp.eq.s32.totalorder %s20, 0
      %p41 = por %p39, %p40
      %p42 = scmp.ne.s32.totalorder %s28, %s29
      %p43 = scmp.eq.s32.totalorder %s21, 1
      %p44 = por %p42, %p43
      %p46 = scmp.ne.s32.totalorder %s29, %s45
      %p47 = scmp.eq.s32.totalorder %s21, 0
      %p48 = por %p46, %p47
      %s50 = sadd.s32 %s49, 1
      %p53 = scmp.eq.s32.totalorder %s15, 1
      %p54 = scmp.ne.s32.totalorder %s49, %s51
      %p55 = scmp.eq.s32.totalorder %s15, 0
      %p56 = por %p54, %p55
      %p57 = scmp.ne.s32.totalorder %s49, %s51
      %p58 = scmp.eq.s32.totalorder %s20, 1
      %p59 = por %p57, %p58
      %p60 = scmp.ne.s32.totalorder %s51, %s52
      %p61 = scmp.eq.s32.totalorder %s20, 0
      %p62 = por %p60, %p61
      %p63 = scmp.ne.s32.totalorder %s51, %s52
      %p64 = scmp.eq.s32.totalorder %s21, 1
      %p65 = por %p63, %p64
      %p67 = scmp.ne.s32.totalorder %s52, %s66
      %p68 = scmp.eq.s32.totalorder %s21, 0
      %p69 = por %p67, %p68
      %s71 = sadd.s32 %s70, 1
      %p74 = scmp.eq.s32.totalorder %s15, 1
      %p75 = scmp.ne.s32.totalorder %s70, %s72
      %p76 = scmp.eq.s32.totalorder %s15, 0
      %p77 = por %p75, %p76
      %p78 = scmp.ne.s32.totalorder %s70, %s72
      %p79 = scmp.eq.s32.totalorder %s20, 1
      %p80 = por %p78, %p79
      %p81 = scmp.ne.s32.totalorder %s72, %s73
      %p82 = scmp.eq.s32.totalorder %s20, 0
      %p83 = por %p81, %p82
      %p84 = scmp.ne.s32.totalorder %s72, %s73
      %p85 = scmp.eq.s32.totalorder %s21, 1
      %p86 = por %p84, %p85
      %p88 = scmp.ne.s32.totalorder %s73, %s87
      %p89 = scmp.eq.s32.totalorder %s21, 0
      %p90 = por %p88, %p89
      %s91 = ssub.s32 %s15, %s22
      %p92 = scmp.eq.s32.totalorder %s91, 0
      %s94 = sadd.s32 %s93, 1
      %s95 = scalar_select %p92, %s93, %s94
      %p98 = pneg %p92
      %p99 = scmp.eq.s32.totalorder %s15, 1
      %p100 = por %p98, %p99
      %p101 = scmp.ne.s32.totalorder %s93, %s96
      %p102 = scmp.eq.s32.totalorder %s15, 0
      %p103 = por %p101, %p102
      %p104 = scmp.ne.s32.totalorder %s93, %s96
      %p105 = scmp.eq.s32.totalorder %s20, 1
      %p106 = por %p104, %p105
      %p107 = scmp.ne.s32.totalorder %s96, %s97
      %p108 = scmp.eq.s32.totalorder %s20, 0
      %p109 = por %p107, %p108
      %p110 = scmp.ne.s32.totalorder %s96, %s97
      %p111 = scmp.eq.s32.totalorder %s21, 1
      %p112 = por %p110, %p111
      %p114 = scmp.ne.s32.totalorder %s97, %s113
      %p115 = scmp.eq.s32.totalorder %s21, 0
      %p116 = por %p114, %p115
      %p117 = scmp.le.s32.totalorder 1, %s15
      %p118 = scmp.lt.s32.totalorder %s15, 3
      %p119 = pnand %p117, %p118
      %p120 = pneg %p119
      // Predicated region
      $region9: #{tpu_custom_call.1} parent=5 // pred_check
        _
      $region10: #{tpu_custom_call.1} parent=5 // pred_check_branch
        %122 = sbr.rel (%p119) target = $region12
      $region11: #{tpu_custom_call.1} parent=5 // pred_region
        %s123 = ssub.s32 %s15, 1
        // Predicated region
        $region13: #{tpu_custom_call.1} parent=11 // pred_check
          %p124 = pneg %p62
        $region14: #{tpu_custom_call.1} parent=11 // pred_check_branch
          %126 = sbr.rel (%p124) target = $region16
        $region15: #{tpu_custom_call.1} parent=11 // pred_region
          _
        $region16: #{tpu_custom_call.1} parent=11 // pred_fallthru
          _
        // Predicated region
        $region17: #{tpu_custom_call.1} parent=11 // pred_check
          %p127 = pneg %p83
        $region18: #{tpu_custom_call.1} parent=11 // pred_check_branch
          %129 = sbr.rel (%p127) target = $region20
        $region19: #{tpu_custom_call.1} parent=11 // pred_region
          _
        $region20: #{tpu_custom_call.1} parent=11 // pred_fallthru
          _
      $region12: #{tpu_custom_call.1} parent=5 // pred_fallthru
        _
      %p130 = scmp.lt.s32.totalorder %s15, 2
      // Predicated region
      $region21: #{tpu_custom_call.1} parent=5 // pred_check
        %p131 = pneg %p130
      $region22: #{tpu_custom_call.1} parent=5 // pred_check_branch
        %133 = sbr.rel (%p131) target = $region24
      $region23: #{tpu_custom_call.1} parent=5 // pred_region
        // Predicated region
        $region25: #{tpu_custom_call.1} parent=23 // pred_check
          %p134 = pneg %p35
        $region26: #{tpu_custom_call.1} parent=23 // pred_check_branch
          %136 = sbr.rel (%p134) target = $region28
        $region27: #{tpu_custom_call.1} parent=23 // pred_region
          %s137 = sand.u32 %s25, 1
          %s138 = scalar_lea.sflag [#allocation3], %s137
          %s139 = sand.u32 %s25, 1
          %s140 = smul.addr %s139, 8
          %s141 = scalar_lea.vmem [#allocation2], %s140
          %s143 = ssub.s32 128, 128
          %144 = vsyncadd %s138, %s143
          %s145 = smul.addr %s15, 128
          %s146 = scalar_lea.hbm %s0, %s145
          %s148 = sshll.u32 %s141, 4
          %s149 = int_to_ptr.vmem [resolvable:$true] %s148
          %151 = dma.hbm_to_vmem [thread:$0]  %s146, 128, %s149, %s138
        $region28: #{tpu_custom_call.1} parent=23 // pred_fallthru
          _
      $region24: #{tpu_custom_call.1} parent=5 // pred_fallthru
        _
      %p152 = scmp.le.s32.totalorder 1, %s15
      %p153 = scmp.lt.s32.totalorder %s15, 3
      %p154 = pnand %p152, %p153
      %p155 = pneg %p154
      // Predicated region
      $region29: #{tpu_custom_call.1} parent=5 // pred_check
        _
      $region30: #{tpu_custom_call.1} parent=5 // pred_check_branch
        %157 = sbr.rel (%p154) target = $region32
      $region31: #{tpu_custom_call.1} parent=5 // pred_region
        %s158 = ssub.s32 %s15, 1
        %s159 = sand.u32 %s28, 1
        %s160 = scalar_lea.sflag [#allocation3], %s159
        %s161 = sand.u32 %s28, 1
        %s162 = smul.addr %s161, 8
        %s163 = scalar_lea.vmem [#allocation2], %s162
        // Predicated region
        $region33: #{tpu_custom_call.1} parent=31 // pred_check
          %p164 = pneg %p41
        $region34: #{tpu_custom_call.1} parent=31 // pred_check_branch
          %166 = sbr.rel (%p164) target = $region36
        $region35: #{tpu_custom_call.1} parent=31 // pred_region
          %167 = dma.done %s160, 128
        $region36: #{tpu_custom_call.1} parent=31 // pred_fallthru
          _
        %s168 = sand.u32 %s28, 1
        %s169 = scalar_lea.sflag [#allocation3], %s168
        %s170 = sand.u32 %s28, 1
        %s171 = smul.addr %s170, 8
        %s172 = scalar_lea.vmem [#allocation2], %s171
        %p173 = pneg %p41
        %p174 = pneg %p38
        %p175 = pneg %p62
        %p176 = pneg %p59
        %p177 = pneg %p83
        %p178 = pneg %p80
        %p179 = pneg %p109
        %p180 = pneg %p106
        %s181 = sand.u32 %s96, 1
        %s182 = scalar_lea.sflag [#allocation4], %s181
        %s183 = sand.u32 %s96, 1
        %s184 = smul.addr %s183, 8
        %s185 = scalar_lea.vmem [#allocation5], %s184
        %v186 = vld [vmem:[%s163] sm:$0xff]
        %vm187 = vcmask 261120
        %v188 = vsel %vm187, %v186, 0.0
        %189 = vadd.xlane.f32.xlu0 %v188
        %v190 = vpop.xlane.xlu0 %189
        %v191 = vmul.f32 %v186, %v186
        %v192 = vsel %vm187, %v191, 0.0
        %193 = vadd.xlane.f32.xlu0 %v192
        %v194 = vpop.xlane.xlu0 %193
        %v195 = vmul.f32 %v190, 0.03125
        %v196 = vmul.f32 %v190, %v195
        %v197 = vsub.f32 %v194, %v196
        %v198 = vmul.f32 %v197, 0.032258064
        %v199 = vadd.f32 %v198, 1e-06
        %v200 = vrsqrt.pop %v199
        %v201 = vsub.f32 %v186, %v195
        %v202 = vmul.f32 %v201, %v200
        %v203 = vld [vmem:[%s1] sm:$0x1]
        %v205 = vlaneseq
        %v206 = vshrl.u32 %v205, 7
        %v207 = vsub.s32 0, %v206
        %v208 = vrot.slane %v203, %v207
        %v210 = vmul.f32 %v202, %v208
        %v211 = vld [vmem:[%s2] sm:$0x1]
        %v213 = vlaneseq
        %v214 = vshrl.u32 %v213, 7
        %v215 = vsub.s32 0, %v214
        %v216 = vrot.slane %v211, %v215
        %v218 = vadd.f32 %v210, %v216
        %219 = vst.msk [vmem:[%s185] sm:$0xff] %vm187, %v218
        %s220 = sand.u32 %s96, 1
        %s221 = scalar_lea.sflag [#allocation4], %s220
        %s222 = sand.u32 %s96, 1
        %s223 = smul.addr %s222, 8
        %s224 = scalar_lea.vmem [#allocation5], %s223
        // Predicated region
        $region37: #{tpu_custom_call.1} parent=31 // pred_check
          %p225 = pneg %p106
        $region38: #{tpu_custom_call.1} parent=31 // pred_check_branch
          %227 = sbr.rel (%p225) target = $region40
        $region39: #{tpu_custom_call.1} parent=31 // pred_region
          %s229 = ssub.s32 128, 128
          %230 = vsyncadd %s221, %s229
          %s231 = smul.addr %s20, 128
          %s232 = scalar_lea.hbm %s3, %s231
          %s234 = sshll.u32 %s224, 4
          %s235 = int_to_ptr.vmem [resolvable:$true] %s234
          %237 = dma.vmem_to_hbm [thread:$0]  %s235, 128, %s232, %s221
        $region40: #{tpu_custom_call.1} parent=31 // pred_fallthru
          _
      $region32: #{tpu_custom_call.1} parent=5 // pred_fallthru
        _
      %p238 = scmp.le.s32.totalorder 2, %s15
      // Predicated region
      $region41: #{tpu_custom_call.1} parent=5 // pred_check
        %p239 = pneg %p238
      $region42: #{tpu_custom_call.1} parent=5 // pred_check_branch
        %241 = sbr.rel (%p239) target = $region44
      $region43: #{tpu_custom_call.1} parent=5 // pred_region
        %s242 = ssub.s32 %s15, 2
        // Predicated region
        $region45: #{tpu_custom_call.1} parent=43 // pred_check
          %p243 = pneg %p112
        $region46: #{tpu_custom_call.1} parent=43 // pred_check_branch
          %245 = sbr.rel (%p243) target = $region48
        $region47: #{tpu_custom_call.1} parent=43 // pred_region
          %s246 = sand.u32 %s97, 1
          %s247 = scalar_lea.sflag [#allocation4], %s246
          %s248 = sand.u32 %s97, 1
          %s249 = smul.addr %s248, 8
          %s250 = scalar_lea.vmem [#allocation5], %s249
          %251 = dma.done %s247, 128
        $region48: #{tpu_custom_call.1} parent=43 // pred_fallthru
          _
      $region44: #{tpu_custom_call.1} parent=5 // pred_fallthru
        _
    $region6: #{tpu_custom_call.1} parent=1 // loop_footer
      %s19 = sadd.s32 1, %s15
    $region7: #{tpu_custom_call.1} parent=1 // loop_footer_branch
      %14 = sbr.rel target = $region3
    $region8: #{tpu_custom_call.1} parent=1 // loop_exit
      _
    %252 = vsyncpa [#allocation3], 1
    %s253 = scalar_lea.sflag [#allocation3], 1
    %254 = vsyncpa %s253, 1
    %255 = vsyncpa [#allocation4], 1
    %s256 = scalar_lea.sflag [#allocation4], 1
    %257 = vsyncpa %s256, 1

</llo_original>
